<compile_context>
chip_gen: v6e
topology: v6e:2x2x1
jax: 0.10.0
libtpu: 0.0.40
codegen_flags: <defaults>
</compile_context>

<pallas_src>
import jax
import jax.numpy as jnp
from jax.experimental import pallas as pl
from jax.experimental.pallas import tpu as pltpu


def _round_up(v, m):
    return (v + m - 1) // m * m


def _vmem_capacity_bytes():
    try:
        return int(pltpu.get_tpu_info().vmem_capacity_bytes)
    except Exception:
        return 64 * 1024 * 1024  # conservative: v7x per-TensorCore VMEM


def _choose_tile_b(B, F, itemsize):
    """Largest batch tile whose double-buffered, lane-padded footprint fits VMEM."""
    lane_f = max(_round_up(F, 128), 128)          # VMEM pads the minor dim to >=128 lanes
    bytes_per_row = lane_f * itemsize
    vmem_cap = _vmem_capacity_bytes()
    # ~1/8 of VMEM per x buffer: 2 buffers (double-buffering) + weight row +
    # output block + compiler scratch still leave ample headroom.
    per_buf = min(vmem_cap // 8, 16 * 1024 * 1024)   # 16 MiB on v5e/v6e, 8 MiB on v7x
    rows = per_buf // bytes_per_row
    rows = max(128, rows // 128 * 128)
    if rows >= B:
        return B                                   # single full-array block
    # Prefer an even number of grid steps so v7x's 2 TensorCores balance.
    grid = pl.cdiv(B, rows)
    if grid > 1 and grid % 2 == 1:
        rows_even = max(128, _round_up(pl.cdiv(B, grid + 1), 128))
        if pl.cdiv(B, rows_even) % 2 == 0:
            rows = rows_even
    return rows


def _linear_kernel(x_ref, w_ref, b_ref, o_ref):
    # x_ref: (TILE_B, F) VMEM tile of the batch
    # w_ref: (1, F)      VMEM, resident across the whole grid
    # b_ref: (1, 1)      SMEM scalar
    # o_ref: (1, 1, TILE_B) lane-dense output block
    acc = jax.lax.dot_general(
        w_ref[...], x_ref[...],
        dimension_numbers=(((1,), (1,)), ((), ())),   # w @ x.T -> (1, TILE_B)
        preferred_element_type=jnp.float32,
    )
    o_ref[0] = (acc + b_ref[0, 0]).astype(o_ref.dtype)


def linear_net_forward(x, weight, bias, *, tile_b=None):
    """y = x @ weight.T + bias, matching nn.Linear(n_feature, 1).

    x: [B, F] f32; weight: [1, F] f32 (PyTorch layout); bias: [1] f32.
    Returns [B, 1] f32.
    """
    B, F = x.shape
    itemsize = jnp.dtype(x.dtype).itemsize
    if tile_b is None:
        tile_b = _choose_tile_b(B, F, itemsize)
    if tile_b >= B:
        tile_b = B      # single grid step; block == full array dims (no alignment needed)
    else:
        assert tile_b % 128 == 0, "tile_b must be a multiple of 128 when tiling"

    grid_b = pl.cdiv(B, tile_b)

    # Padding-aware VMEM need -> explicit scoped limit (portable across v5e/v6e/v7x).
    lane_f = max(_round_up(F, 128), 128)
    x_buf = _round_up(tile_b, 8) * lane_f * itemsize          # one x tile, lane/sublane padded
    o_buf = 8 * _round_up(tile_b, 128) * itemsize             # one (1,1,TILE_B) output block
    w_buf = 8 * lane_f * itemsize                             # resident weight row
    needed = 2 * (x_buf + o_buf) + 2 * w_buf + (4 << 20)      # double-buffered + margin
    vmem_cap = _vmem_capacity_bytes()
    vmem_limit = int(min(max(needed, 32 << 20), vmem_cap - (4 << 20)))

    b_smem = bias.reshape(1, 1).astype(jnp.float32)

    out = pl.pallas_call(
        _linear_kernel,
        out_shape=jax.ShapeDtypeStruct((grid_b, 1, tile_b), x.dtype),
        grid_spec=pltpu.PrefetchScalarGridSpec(
            num_scalar_prefetch=0,
            grid=(grid_b,),
            in_specs=[
                pl.BlockSpec((tile_b, F), lambda i: (i, 0)),   # x batch tile (last block may be partial)
                pl.BlockSpec((1, F), lambda i: (0, 0)),        # weight (resident in VMEM)
                pl.BlockSpec(memory_space=pltpu.SMEM),         # bias scalar
            ],
            out_specs=pl.BlockSpec((1, 1, tile_b), lambda i: (i, 0, 0)),
        ),
        compiler_params=pltpu.CompilerParams(
            dimension_semantics=("parallel",),
            vmem_limit_bytes=vmem_limit,
        ),
    )(x, weight, b_smem)

    # (grid_b, 1, tile_b) -> (B, 1); garbage tail rows (if any) are sliced off.
    return out.reshape(grid_b * tile_b, 1)[:B]


if __name__ == "__main__":
    key = jax.random.PRNGKey(0)
    kx, kw, kb = jax.random.split(key, 3)

    # n_feature = 4; batch chosen to exercise the ragged-tail tiled path too.
    B, F = 300, 4
    x = jax.random.normal(kx, (B, F), dtype=jnp.float32)
    weight = jax.random.normal(kw, (1, F), dtype=jnp.float32) * 0.1
    bias = jax.random.normal(kb, (1,), dtype=jnp.float32) * 0.1

    y_ref = x @ weight.T + bias

    # 1) Default path: whole problem in a single full-array block (no per-step overhead).
    y_single = jax.block_until_ready(linear_net_forward(x, weight, bias))
    assert y_single.shape == (B, 1)
    assert jnp.allclose(y_single, y_ref, atol=1e-5, rtol=1e-5), "single-block mismatch"

    # 2) Forced tiled path: grid=(3,), ragged final block handled without any jnp.pad copy.
    y_tiled = jax.block_until_ready(linear_net_forward(x, weight, bias, tile_b=128))
    assert y_tiled.shape == (B, 1)
    assert jnp.allclose(y_tiled, y_ref, atol=1e-5, rtol=1e-5), "tiled-path mismatch"

    print("KERNEL_OK")
</pallas_src>

<mosaic_0001>
module attributes {stable_mosaic.version = 11 : i64} {
  func.func @_linear_kernel(%arg0: i32, %arg1: memref<300x4xf32, #tpu.memory_space<vmem>>, %arg2: memref<1x4xf32, #tpu.memory_space<vmem>>, %arg3: memref<1x1xf32, #tpu.memory_space<smem>>, %arg4: memref<1x1x300xf32, #tpu.memory_space<vmem>>) attributes {dimension_semantics = [#tpu.dimension_semantics<parallel>], iteration_bounds = array<i64: 1>, scalar_prefetch = 0 : i64, scratch_operands = 0 : i64, tpu.core_type = #tpu.core_type<tc>, window_params = [{transform_indices = @transform_0, window_bounds = array<i64: 300, 4>}, {pipeline_mode = #tpu.pipeline_mode<synchronous>, transform_indices = @transform_1, window_bounds = array<i64: 1, 4>}, {transform_indices = @transform_2, window_bounds = array<i64: 1, 1>}, {transform_indices = @transform_3, window_bounds = array<i64: 1, 1, 300>}]} {
    %c0 = arith.constant 0 : index
    %c0_0 = arith.constant 0 : index
    %0 = vector.load %arg2[%c0, %c0_0] : memref<1x4xf32, #tpu.memory_space<vmem>>, vector<1x4xf32>
    %c0_1 = arith.constant 0 : index
    %c0_2 = arith.constant 0 : index
    %1 = vector.load %arg1[%c0_1, %c0_2] : memref<300x4xf32, #tpu.memory_space<vmem>>, vector<300x4xf32>
    %cst = arith.constant dense<0.000000e+00> : vector<1x300xf32>
    %2 = tpu.matmul %0, %1, %cst {dimension_numbers = #tpu.dot_dimension_numbers<[1], [1], [0], [0], [0, 0, 1, 0], [], []>} : vector<1x4xf32>, vector<300x4xf32>, vector<1x300xf32> -> vector<1x300xf32>
    %c0_3 = arith.constant 0 : index
    %c0_4 = arith.constant 0 : index
    %3 = memref.load %arg3[%c0_3, %c0_4] : memref<1x1xf32, #tpu.memory_space<smem>>
    %4 = vector.broadcast %3 : f32 to vector<1x300xf32>
    %5 = arith.addf %2, %4 : vector<1x300xf32>
    %c0_5 = arith.constant 0 : index
    %c0_6 = arith.constant 0 : index
    %c0_7 = arith.constant 0 : index
    %6 = vector.load %arg4[%c0_5, %c0_6, %c0_7] : memref<1x1x300xf32, #tpu.memory_space<vmem>>, vector<1x1x300xf32>
    %7 = vector.shape_cast %6 : vector<1x1x300xf32> to vector<1x300xf32>
    %8 = vector.shape_cast %5 : vector<1x300xf32> to vector<1x1x300xf32>
    tpu.vector_store %arg4[%c0_5, %c0_6, %c0_7], %8 {strides = array<i32>} : memref<1x1x300xf32, #tpu.memory_space<vmem>>, vector<1x1x300xf32>,
    return
  }
  func.func @transform_0(%arg0: i32) -> (i32, i32) {
    %c0_i32 = arith.constant 0 : i32
    %c0_i32_0 = arith.constant 0 : i32
    return %arg0, %c0_i32 : i32, i32
  }
  func.func @transform_1(%arg0: i32) -> (i32, i32) {
    %c0_i32 = arith.constant 0 : i32
    %c0_i32_0 = arith.constant 0 : i32
    %c0_i32_1 = arith.constant 0 : i32
    return %c0_i32, %c0_i32_0 : i32, i32
  }
  func.func @transform_2(%arg0: i32) -> (i32, i32) {
    %c0_i32 = arith.constant 0 : i32
    %c0_i32_0 = arith.constant 0 : i32
    %c0_i32_1 = arith.constant 0 : i32
    return %c0_i32, %c0_i32_0 : i32, i32
  }
  func.func @transform_3(%arg0: i32) -> (i32, i32, i32) {
    %c0_i32 = arith.constant 0 : i32
    %c0_i32_0 = arith.constant 0 : i32
    %c0_i32_1 = arith.constant 0 : i32
    return %arg0, %c0_i32, %c0_i32_0 : i32, i32, i32
  }
}

</mosaic_0001>

<llo_original>
// kernel: tpu_custom_call.1
$region0: #{tpu_custom_call.1}
  #allocation0 [shape = 'u32[]', space=smem, size = 0x4, offset = 0x4, fixed_abs, tag = 'smem constant byte address 0x4 - core index']
  #allocation1 [shape = 'u32[144,128]{1,0:T(1,128)}', space=vmem, size = 0x12000, scoped, tag = 'internal scratch']
  #allocation2 [shape = 'f32[1,1]{1,0:T(1,128)S(6)}', space=smem, size = 0x200, scoped, tag = 'scoped memory for tpu_custom_call.1']
  %s0 = inlined_call_operand.vmem [shape: f32[300,4], index: 0, kind: input, shape index: {}]
  %s1 = inlined_call_operand.vmem [shape: f32[1,4], index: 1, kind: input, shape index: {}]
  %s2 = inlined_call_operand.<no memory space> [shape: f32[1,1], index: 2, kind: input, shape index: {}]
  %s3 = inlined_call_operand.hbm [shape: f32[1,1,300], index: 3, kind: output, shape index: {}]
  %s4 = sld [smem:[#allocation0]]
  $region22: #{tpu_custom_call.1} parent=0
    _
  %s6 = ssub.s32 1, %s4
  %s7 = scalar_select 0, %s6, %s4
  %8 = sst [smem:[#allocation2]] %s2
  $region1: #{tpu_custom_call.1} parent=0
    #allocation3 [shape = 'u8[1536]{0}', space=vmem, size = 0x800, scoped, tag = 'output window, operand 0, single buffered']
    #allocation4 [shape = 's32[1]{0}', space=sflag, size = 0x4, scoped, tag = 'scoped memory for tpu_custom_call.1']
    %9 = vsyncpa [#allocation4], 0
    // Predicated region
    $region2: #{tpu_custom_call.1} parent=1 // pred_check
      _
    $region3: #{tpu_custom_call.1} parent=1 // pred_check_branch
      %11 = sbr.rel (0) target = $region5
    $region4: #{tpu_custom_call.1} parent=1 // pred_region
      _
    $region5: #{tpu_custom_call.1} parent=1 // pred_fallthru
      _
    // Predicated region
    $region6: #{tpu_custom_call.1} parent=1 // pred_check
      _
    $region7: #{tpu_custom_call.1} parent=1 // pred_check_branch
      %13 = sbr.rel (0) target = $region9
    $region8: #{tpu_custom_call.1} parent=1 // pred_region
      _
    $region9: #{tpu_custom_call.1} parent=1 // pred_fallthru
      _
    // Predicated region
    $region10: #{tpu_custom_call.1} parent=1 // pred_check
      _
    $region11: #{tpu_custom_call.1} parent=1 // pred_check_branch
      %15 = sbr.rel (0) target = $region13
    $region12: #{tpu_custom_call.1} parent=1 // pred_region
      _
    $region13: #{tpu_custom_call.1} parent=1 // pred_fallthru
      _
    %v16 = vld [vmem:[%s1] sm:$0x1]
    %v17 = vld [vmem:[%s0] sm:$0xff]
    %v18 = vld [vmem:[%s0 + $0x8] sm:$0xff]
    %v19 = vld [vmem:[%s0 + $0x10] sm:$0xff]
    %v20 = vld [vmem:[%s0 + $0x18] sm:$0xff]
    %v21 = vld [vmem:[%s0 + $0x20] sm:$0xff]
    %v22 = vld [vmem:[%s0 + $0x28] sm:$0xff]
    %v23 = vld [vmem:[%s0 + $0x30] sm:$0xff]
    %v24 = vld [vmem:[%s0 + $0x38] sm:$0xff]
    %v25 = vld [vmem:[%s0 + $0x40] sm:$0xff]
    %v26 = vld [vmem:[%s0 + $0x48] sm:$0xff]
    %v27 = vld [vmem:[%s0 + $0x50] sm:$0xff]
    %v28 = vld [vmem:[%s0 + $0x58] sm:$0xff]
    %v29 = vld [vmem:[%s0 + $0x60] sm:$0xff]
    %v30 = vld [vmem:[%s0 + $0x68] sm:$0xff]
    %v31 = vld [vmem:[%s0 + $0x70] sm:$0xff]
    %v32 = vld [vmem:[%s0 + $0x78] sm:$0xff]
    %v33 = vld [vmem:[%s0 + $0x80] sm:$0xff]
    %v34 = vld [vmem:[%s0 + $0x88] sm:$0xff]
    %v35 = vld [vmem:[%s0 + $0x90] sm:$0xff]
    %v36 = vld [vmem:[%s0 + $0x98] sm:$0xff]
    %v37 = vld [vmem:[%s0 + $0xa0] sm:$0xff]
    %v38 = vld [vmem:[%s0 + $0xa8] sm:$0xff]
    %v39 = vld [vmem:[%s0 + $0xb0] sm:$0xff]
    %v40 = vld [vmem:[%s0 + $0xb8] sm:$0xff]
    %v41 = vld [vmem:[%s0 + $0xc0] sm:$0xff]
    %v42 = vld [vmem:[%s0 + $0xc8] sm:$0xff]
    %v43 = vld [vmem:[%s0 + $0xd0] sm:$0xff]
    %v44 = vld [vmem:[%s0 + $0xd8] sm:$0xff]
    %v45 = vld [vmem:[%s0 + $0xe0] sm:$0xff]
    %v46 = vld [vmem:[%s0 + $0xe8] sm:$0xff]
    %v47 = vld [vmem:[%s0 + $0xf0] sm:$0xff]
    %v48 = vld [vmem:[%s0 + $0xf8] sm:$0xff]
    %v49 = vld [vmem:[%s0 + $0x100] sm:$0xff]
    %v50 = vld [vmem:[%s0 + $0x108] sm:$0xff]
    %v51 = vld [vmem:[%s0 + $0x110] sm:$0xff]
    %v52 = vld [vmem:[%s0 + $0x118] sm:$0xff]
    %v53 = vld [vmem:[%s0 + $0x120] sm:$0xff]
    %v54 = vld [vmem:[%s0 + $0x128] sm:$0xf]
    %s55 = sld [smem:[#allocation2]]
    %v56 = vstv %s55
    %vm57 = vcmask 31744
    %v59 = vsel %vm57, %v16, 0
    %v62 = vsel %vm57, %v17, 0
    %v65 = vsel %vm57, %v18, 0
    %v68 = vsel %vm57, %v19, 0
    %v71 = vsel %vm57, %v20, 0
    %v74 = vsel %vm57, %v21, 0
    %v77 = vsel %vm57, %v22, 0
    %v80 = vsel %vm57, %v23, 0
    %v83 = vsel %vm57, %v24, 0
    %v86 = vsel %vm57, %v25, 0
    %v89 = vsel %vm57, %v26, 0
    %v92 = vsel %vm57, %v27, 0
    %v95 = vsel %vm57, %v28, 0
    %v98 = vsel %vm57, %v29, 0
    %v101 = vsel %vm57, %v30, 0
    %v104 = vsel %vm57, %v31, 0
    %v107 = vsel %vm57, %v32, 0
    %v110 = vsel %vm57, %v33, 0
    %v113 = vsel %vm57, %v34, 0
    %v116 = vsel %vm57, %v35, 0
    %v119 = vsel %vm57, %v36, 0
    %v122 = vsel %vm57, %v37, 0
    %v125 = vsel %vm57, %v38, 0
    %v128 = vsel %vm57, %v39, 0
    %v131 = vsel %vm57, %v40, 0
    %v134 = vsel %vm57, %v41, 0
    %v137 = vsel %vm57, %v42, 0
    %v140 = vsel %vm57, %v43, 0
    %v143 = vsel %vm57, %v44, 0
    %v146 = vsel %vm57, %v45, 0
    %v149 = vsel %vm57, %v46, 0
    %v152 = vsel %vm57, %v47, 0
    %v155 = vsel %vm57, %v48, 0
    %v158 = vsel %vm57, %v49, 0
    %v161 = vsel %vm57, %v50, 0
    %v164 = vsel %vm57, %v51, 0
    %v167 = vsel %vm57, %v52, 0
    %v170 = vsel %vm57, %v53, 0
    %v173 = vsel %vm57, %v54, 0
    %175 = vmatprep.subr.mxu0 0.0
    %176 = vmatpush1.xpose.msra.mxu0 %v107
    %177 = vmatprep.subr.mxu0 0.0
    %178 = vmatpush1.xpose.msra.mxu0 %v104
    %179 = vmatprep.subr.mxu0 0.0
    %180 = vmatpush1.xpose.msra.mxu0 %v101
    %181 = vmatprep.subr.mxu0 0.0
    %182 = vmatpush1.xpose.msra.mxu0 %v98
    %183 = vmatprep.subr.mxu0 0.0
    %184 = vmatpush1.xpose.msra.mxu0 %v95
    %185 = vmatprep.subr.mxu0 0.0
    %186 = vmatpush1.xpose.msra.mxu0 %v92
    %187 = vmatprep.subr.mxu0 0.0
    %188 = vmatpush1.xpose.msra.mxu0 %v89
    %189 = vmatprep.subr.mxu0 0.0
    %190 = vmatpush1.xpose.msra.mxu0 %v86
    %191 = vmatprep.subr.mxu0 0.0
    %192 = vmatpush1.xpose.msra.mxu0 %v83
    %193 = vmatprep.subr.mxu0 0.0
    %194 = vmatpush1.xpose.msra.mxu0 %v80
    %195 = vmatprep.subr.mxu0 0.0
    %196 = vmatpush1.xpose.msra.mxu0 %v77
    %197 = vmatprep.subr.mxu0 0.0
    %198 = vmatpush1.xpose.msra.mxu0 %v74
    %199 = vmatprep.subr.mxu0 0.0
    %200 = vmatpush1.xpose.msra.mxu0 %v71
    %201 = vmatprep.subr.mxu0 0.0
    %202 = vmatpush1.xpose.msra.mxu0 %v68
    %203 = vmatprep.subr.mxu0 0.0
    %204 = vmatpush1.xpose.msra.mxu0 %v65
    %205 = vmatprep.subr.mxu0 0.0
    %206 = vmatpush1.xpose.msra.mxu0 %v62
    %207 = vmatprep.subr.mxu0 0.0
    %208 = vmatpush2.xpose.msra.mxu0 %v155
    %209 = vmatprep.subr.mxu0 0.0
    %210 = vmatpush2.xpose.msra.mxu0 %v152
    %211 = vmatprep.subr.mxu0 0.0
    %212 = vmatpush2.xpose.msra.mxu0 %v149
    %213 = vmatprep.subr.mxu0 0.0
    %214 = vmatpush2.xpose.msra.mxu0 %v146
    %215 = vmatprep.subr.mxu0 0.0
    %216 = vmatpush2.xpose.msra.mxu0 %v143
    %217 = vmatprep.subr.mxu0 0.0
    %218 = vmatpush2.xpose.msra.mxu0 %v140
    %219 = vmatprep.subr.mxu0 0.0
    %220 = vmatpush2.xpose.msra.mxu0 %v137
    %221 = vmatprep.subr.mxu0 0.0
    %222 = vmatpush2.xpose.msra.mxu0 %v134
    %223 = vmatprep.subr.mxu0 0.0
    %224 = vmatpush2.xpose.msra.mxu0 %v131
    %225 = vmatprep.subr.mxu0 0.0
    %226 = vmatpush2.xpose.msra.mxu0 %v128
    %227 = vmatprep.subr.mxu0 0.0
    %228 = vmatpush2.xpose.msra.mxu0 %v125
    %229 = vmatprep.subr.mxu0 0.0
    %230 = vmatpush2.xpose.msra.mxu0 %v122
    %231 = vmatprep.subr.mxu0 0.0
    %232 = vmatpush2.xpose.msra.mxu0 %v119
    %233 = vmatprep.subr.mxu0 0.0
    %234 = vmatpush2.xpose.msra.mxu0 %v116
    %235 = vmatprep.subr.mxu0 0.0
    %236 = vmatpush2.xpose.msra.mxu0 %v113
    %237 = vmatprep.subr.mxu0 0.0
    %238 = vmatpush2.xpose.msra.mxu0 %v110
    %239 = vmatprep.mubr.f32.mxu0 0.0
    %240 = vmatmul.mubr.f32.gmra.mxu0 %v59
    %v241 = vpop.f32.mrf.mxu0
    %v242 = vadd.f32 %v56, %v241
    %v243 = vpop.f32.mrf.mxu0
    %v244 = vadd.f32 %v56, %v243
    %245 = vdwg.mxu0
    %246 = vmatprep.subr.mxu0 0.0
    %247 = vmatpush1.xpose.msra.mxu0 0.0
    %248 = vmatprep.subr.mxu0 0.0
    %249 = vmatpush1.xpose.msra.mxu0 0.0
    %250 = vmatprep.subr.mxu0 0.0
    %251 = vmatpush1.xpose.msra.mxu0 0.0
    %252 = vmatprep.subr.mxu0 0.0
    %253 = vmatpush1.xpose.msra.mxu0 0.0
    %254 = vmatprep.subr.mxu0 0.0
    %255 = vmatpush1.xpose.msra.mxu0 0.0
    %256 = vmatprep.subr.mxu0 0.0
    %257 = vmatpush1.xpose.msra.mxu0 0.0
    %258 = vmatprep.subr.mxu0 0.0
    %259 = vmatpush1.xpose.msra.mxu0 0.0
    %260 = vmatprep.subr.mxu0 0.0
    %261 = vmatpush1.xpose.msra.mxu0 0.0
    %262 = vmatprep.subr.mxu0 0.0
    %263 = vmatpush1.xpose.msra.mxu0 0.0
    %264 = vmatprep.subr.mxu0 0.0
    %265 = vmatpush1.xpose.msra.mxu0 0.0
    %266 = vmatprep.subr.mxu0 0.0
    %267 = vmatpush1.xpose.msra.mxu0 %v173
    %268 = vmatprep.subr.mxu0 0.0
    %269 = vmatpush1.xpose.msra.mxu0 %v170
    %270 = vmatprep.subr.mxu0 0.0
    %271 = vmatpush1.xpose.msra.mxu0 %v167
    %272 = vmatprep.subr.mxu0 0.0
    %273 = vmatpush1.xpose.msra.mxu0 %v164
    %274 = vmatprep.subr.mxu0 0.0
    %275 = vmatpush1.xpose.msra.mxu0 %v161
    %276 = vmatprep.subr.mxu0 0.0
    %277 = vmatpush1.xpose.msra.mxu0 %v158
    %278 = vmatprep.subr.mxu0 0.0
    %279 = vmatpush2.xpose.msra.mxu0 0.0
    %280 = vmatprep.subr.mxu0 0.0
    %281 = vmatpush2.xpose.msra.mxu0 0.0
    %282 = vmatprep.subr.mxu0 0.0
    %283 = vmatpush2.xpose.msra.mxu0 0.0
    %284 = vmatprep.subr.mxu0 0.0
    %285 = vmatpush2.xpose.msra.mxu0 0.0
    %286 = vmatprep.subr.mxu0 0.0
    %287 = vmatpush2.xpose.msra.mxu0 0.0
    %288 = vmatprep.subr.mxu0 0.0
    %289 = vmatpush2.xpose.msra.mxu0 0.0
    %290 = vmatprep.subr.mxu0 0.0
    %291 = vmatpush2.xpose.msra.mxu0 0.0
    %292 = vmatprep.subr.mxu0 0.0
    %293 = vmatpush2.xpose.msra.mxu0 0.0
    %294 = vmatprep.subr.mxu0 0.0
    %295 = vmatpush2.xpose.msra.mxu0 0.0
    %296 = vmatprep.subr.mxu0 0.0
    %297 = vmatpush2.xpose.msra.mxu0 0.0
    %298 = vmatprep.subr.mxu0 0.0
    %299 = vmatpush2.xpose.msra.mxu0 0.0
    %300 = vmatprep.subr.mxu0 0.0
    %301 = vmatpush2.xpose.msra.mxu0 0.0
    %302 = vmatprep.subr.mxu0 0.0
    %303 = vmatpush2.xpose.msra.mxu0 0.0
    %304 = vmatprep.subr.mxu0 0.0
    %305 = vmatpush2.xpose.msra.mxu0 0.0
    %306 = vmatprep.subr.mxu0 0.0
    %307 = vmatpush2.xpose.msra.mxu0 0.0
    %308 = vmatprep.subr.mxu0 0.0
    %309 = vmatpush2.xpose.msra.mxu0 0.0
    %310 = vmatprep.mubr.f32.mxu0 0.0
    %311 = vmatmul.mubr.f32.gmra.mxu0 %v59
    %v312 = vpop.f32.mrf.mxu0
    %v313 = vadd.f32 %v56, %v312
    %v314 = vpop.f32.mrf.mxu0
    %315 = vdwg.mxu0
    %v319 = vcombine.low %v242, %v244
    %v321 = vunpack.c.l.s4 1966171168
    %v322 = vunpack.c.0.s8 %v321
    %v323 = vlaneseq
    %v324 = vshrl.u32 %v323, 7
    %v325 = vsub.s32 %v322, %v324
    %v326 = vrot.slane %v319, %v325
    %v328 = vunpack.c.l.s4 1966171168
    %v329 = vunpack.c.0.s8 %v328
    %v330 = vlaneseq
    %v331 = vshrl.u32 %v330, 7
    %v332 = vsub.s32 %v329, %v331
    %v333 = vrot.slane %v313, %v332
    %v334 = vcombine.low %v326, %v333
    %v336 = vunpack.c.l.s4 1966171168
    %v337 = vunpack.c.0.s8 %v336
    %v338 = vlaneseq
    %v339 = vshrl.u32 %v338, 7
    %v340 = vsub.s32 %v337, %v339
    %v341 = vrot.slane %v334, %v340
    %v343 = vlaneseq
    %vm344 = vcmp.ge.s32.totalorder %v343, 0
    %vm345 = vcmp.lt.s32.totalorder %v343, 300
    %vm346 = vmand %vm344, %vm345
    %347 = vst.msk [vmem:[#allocation3] sm:$0x7] %vm346, %v341
    // Predicated region
    $region14: #{tpu_custom_call.1} parent=1 // pred_check
      _
    $region15: #{tpu_custom_call.1} parent=1 // pred_check_branch
      %349 = sbr.rel (0) target = $region17
    $region16: #{tpu_custom_call.1} parent=1 // pred_region
      %s351 = ssub.s32 48, 48
      %352 = vsyncadd [#allocation4], %s351
      %s354 = sshll.u32 [#allocation3], 4
      %s355 = int_to_ptr.vmem [resolvable:$true] %s354
      %357 = dma.vmem_to_hbm [thread:$0]  %s355, 48, %s3, [#allocation4]
    $region17: #{tpu_custom_call.1} parent=1 // pred_fallthru
      _
    // Predicated region
    $region18: #{tpu_custom_call.1} parent=1 // pred_check
      _
    $region19: #{tpu_custom_call.1} parent=1 // pred_check_branch
      %359 = sbr.rel (0) target = $region21
    $region20: #{tpu_custom_call.1} parent=1 // pred_region
      %360 = dma.done [#allocation4], 48
    $region21: #{tpu_custom_call.1} parent=1 // pred_fallthru
      _
    %361 = vsyncpa [#allocation4], 1

</llo_original>
